<compile_context>
chip_gen: v6e
topology: v6e:2x2x1
jax: 0.10.0
libtpu: 0.0.40
codegen_flags: <defaults>
</compile_context>

<pallas_src>
import jax
import jax.numpy as jnp
from jax.experimental import pallas as pl
from jax.experimental.pallas import tpu as pltpu


def _round_up(v, m):
    return ((v + m - 1) // m) * m


def _mlp_kernel(x_ref, w1_ref, b1_ref, w2_ref, b2_ref, wc_ref, bc_ref, out_ref):
    # layer1 + ReLU  (dropout -> eval-mode identity).  bf16 MXU inputs, f32 acc.
    h1 = jnp.dot(x_ref[...], w1_ref[...],
                 preferred_element_type=jnp.float32) + b1_ref[...]
    h1 = jnp.maximum(h1, 0.0)

    # layer2 + ReLU.
    hidden = jnp.dot(h1.astype(jnp.bfloat16), w2_ref[...],
                     preferred_element_type=jnp.float32) + b2_ref[...]
    hidden = jnp.maximum(hidden, 0.0)

    # layer3 fused with the concat:  Wc = [W3.T | I_H | 0]  (lane-dense) so
    #   hidden @ Wc + bc == [ logits | hidden | 0 ].
    # Kept f32 so the hidden passthrough is exact w.r.t. the f32 hidden.
    out = jnp.dot(hidden, wc_ref[...],
                  preferred_element_type=jnp.float32) + bc_ref[...]
    out_ref[...] = out.astype(out_ref.dtype)


def prepare_classifier_params(w1, b1, w2, b2, w3, b3):
    """One-time weight prep (hoisted out of the hot path)."""
    hidden_size, input_size = w1.shape
    h_pad = _round_up(hidden_size, 128)            # lane-dense intermediates
    out_dim = 2 + hidden_size                      # logits + hidden
    n_pad = _round_up(out_dim, 128)                # lane-dense output slab
    f32 = jnp.float32

    # layer1 / layer2: zero-pad hidden lanes; relu(x@0 + 0) == 0 keeps padding inert.
    w1t = jnp.pad(w1.astype(f32).T,
                  ((0, 0), (0, h_pad - hidden_size))).astype(jnp.bfloat16)
    b1p = jnp.pad(b1.astype(f32), (0, h_pad - hidden_size)).reshape(1, h_pad)
    w2t = jnp.pad(w2.astype(f32).T,
                  ((0, h_pad - hidden_size),
                   (0, h_pad - hidden_size))).astype(jnp.bfloat16)
    b2p = jnp.pad(b2.astype(f32), (0, h_pad - hidden_size)).reshape(1, h_pad)

    # layer3 fused with the hidden passthrough (identity block), zero padded.
    wc = jnp.concatenate([w3.astype(f32).T,
                          jnp.eye(hidden_size, dtype=f32)], axis=1)
    wc = jnp.pad(wc, ((0, h_pad - hidden_size), (0, n_pad - out_dim)))  # [h_pad, n_pad]
    bc = jnp.concatenate([b3.astype(f32), jnp.zeros((hidden_size,), f32)])
    bc = jnp.pad(bc, (0, n_pad - out_dim)).reshape(1, n_pad)            # [1, n_pad]

    dims = dict(input_size=input_size, hidden_size=hidden_size,
                h_pad=h_pad, out_dim=out_dim, n_pad=n_pad)
    return (w1t, b1p, w2t, b2p, wc, bc), dims


def classifier_with_hidden_state(x, params, dims, *, tb_target=1024,
                                 return_padded_slab=False):
    """Fused MLP forward.  x: [B, input_size] f32."""
    w1t, b1p, w2t, b2p, wc, bc = params
    input_size = dims["input_size"]
    h_pad, out_dim, n_pad = dims["h_pad"], dims["out_dim"], dims["n_pad"]
    B = x.shape[0]

    # Batch tiling: pad at most to the next multiple of 8 (no tile-multiple pad);
    # large tiles for HBM-roofline efficiency, but keep >= 2 grid steps when
    # possible so the "parallel" axis shards across v7x's two TensorCores.
    b8 = _round_up(max(B, 8), 8)
    if b8 <= 8:
        tb = b8
    else:
        tb = min(tb_target, _round_up(pl.cdiv(b8, 2), 8))
    grid = (pl.cdiv(b8, tb),)

    x_bf = x.astype(jnp.bfloat16)
    if b8 != B:
        x_bf = jnp.pad(x_bf, ((0, b8 - B), (0, 0)))

    flops = 2 * b8 * (input_size * h_pad + h_pad * h_pad + h_pad * n_pad)
    bytes_accessed = (2 * (b8 * input_size + w1t.size + w2t.size)          # bf16
                      + 4 * (b8 * n_pad + wc.size
                             + b1p.size + b2p.size + bc.size))             # f32

    const = lambda i: (0, 0)       # weights/biases VMEM-resident across the grid

    out_full = pl.pallas_call(
        _mlp_kernel,
        out_shape=jax.ShapeDtypeStruct((b8, n_pad), jnp.float32),
        grid=grid,
        in_specs=[
            pl.BlockSpec((tb, input_size), lambda i: (i, 0)),   # x tile   (bf16)
            pl.BlockSpec((input_size, h_pad), const),           # W1.T     (bf16)
            pl.BlockSpec((1, h_pad), const),                    # b1       (f32)
            pl.BlockSpec((h_pad, h_pad), const),                # W2.T     (bf16)
            pl.BlockSpec((1, h_pad), const),                    # b2       (f32)
            pl.BlockSpec((h_pad, n_pad), const),                # Wc       (f32)
            pl.BlockSpec((1, n_pad), const),                    # bc       (f32)
        ],
        out_specs=pl.BlockSpec((tb, n_pad), lambda i: (i, 0)),
        compiler_params=pltpu.CompilerParams(
            dimension_semantics=("parallel",)),
        cost_estimate=pl.CostEstimate(
            flops=flops, transcendentals=0, bytes_accessed=bytes_accessed),
    )(x_bf, w1t, b1p, w2t, b2p, wc, bc)

    if return_padded_slab:
        # Lane-dense [b8, n_pad] slab; columns [:2+hidden] are meaningful.
        return out_full
    return out_full[:B, :out_dim]


def _init_params(key, input_size, hidden_size):
    """Deterministic PyTorch-Linear-style uniform init."""
    ks = jax.random.split(key, 6)

    def lin_init(kw, kb, out_f, in_f):
        bound = 1.0 / jnp.sqrt(in_f)
        w = jax.random.uniform(kw, (out_f, in_f), jnp.float32, -bound, bound)
        b = jax.random.uniform(kb, (out_f,), jnp.float32, -bound, bound)
        return w, b

    w1, b1 = lin_init(ks[0], ks[1], hidden_size, input_size)
    w2, b2 = lin_init(ks[2], ks[3], hidden_size, hidden_size)
    w3, b3 = lin_init(ks[4], ks[5], 2, hidden_size)
    return w1, b1, w2, b2, w3, b3


if __name__ == "__main__":
    key = jax.random.PRNGKey(0)
    k_x, k_p = jax.random.split(key)

    batch = 8
    input_size = 32
    hidden_size = 32

    x = jax.random.normal(k_x, (batch, input_size), jnp.float32)
    w1, b1, w2, b2, w3, b3 = _init_params(k_p, input_size, hidden_size)

    params, dims = prepare_classifier_params(w1, b1, w2, b2, w3, b3)
    out = classifier_with_hidden_state(x, params, dims)
    out = jax.block_until_ready(out)

    # Pure-JAX f32 reference (eval-mode semantics of the PyTorch module).
    h1 = jnp.maximum(x @ w1.T + b1, 0.0)
    hidden = jnp.maximum(h1 @ w2.T + b2, 0.0)
    ref = jnp.concatenate([hidden @ w3.T + b3, hidden], axis=1)

    assert out.shape == (batch, 2 + hidden_size), out.shape
    # bf16 matmul inputs (f32 accumulation) -> tolerance loosened vs f32 ref.
    max_err = float(jnp.abs(out - ref).max())
    assert jnp.allclose(out, ref, atol=3e-2, rtol=3e-2), max_err

    print("KERNEL_OK")
</pallas_src>

<mosaic_0001>
module attributes {stable_mosaic.version = 11 : i64} {
  func.func @_mlp_kernel(%arg0: i32, %arg1: memref<8x32xbf16, #tpu.memory_space<vmem>>, %arg2: memref<32x128xbf16, #tpu.memory_space<vmem>>, %arg3: memref<1x128xf32, #tpu.memory_space<vmem>>, %arg4: memref<128x128xbf16, #tpu.memory_space<vmem>>, %arg5: memref<1x128xf32, #tpu.memory_space<vmem>>, %arg6: memref<128x128xf32, #tpu.memory_space<vmem>>, %arg7: memref<1x128xf32, #tpu.memory_space<vmem>>, %arg8: memref<8x128xf32, #tpu.memory_space<vmem>>) attributes {dimension_semantics = [#tpu.dimension_semantics<parallel>], iteration_bounds = array<i64: 1>, scalar_prefetch = 0 : i64, scratch_operands = 0 : i64, tpu.core_type = #tpu.core_type<tc>, window_params = [{transform_indices = @transform_0, window_bounds = array<i64: 8, 32>}, {pipeline_mode = #tpu.pipeline_mode<synchronous>, transform_indices = @transform_1, window_bounds = array<i64: 32, 128>}, {pipeline_mode = #tpu.pipeline_mode<synchronous>, transform_indices = @transform_2, window_bounds = array<i64: 1, 128>}, {pipeline_mode = #tpu.pipeline_mode<synchronous>, transform_indices = @transform_3, window_bounds = array<i64: 128, 128>}, {pipeline_mode = #tpu.pipeline_mode<synchronous>, transform_indices = @transform_4, window_bounds = array<i64: 1, 128>}, {pipeline_mode = #tpu.pipeline_mode<synchronous>, transform_indices = @transform_5, window_bounds = array<i64: 128, 128>}, {pipeline_mode = #tpu.pipeline_mode<synchronous>, transform_indices = @transform_6, window_bounds = array<i64: 1, 128>}, {transform_indices = @transform_7, window_bounds = array<i64: 8, 128>}]} {
    %c0 = arith.constant 0 : index
    %c0_0 = arith.constant 0 : index
    %0 = vector.load %arg1[%c0, %c0_0] : memref<8x32xbf16, #tpu.memory_space<vmem>>, vector<8x32xbf16>
    %c0_1 = arith.constant 0 : index
    %c0_2 = arith.constant 0 : index
    %1 = vector.load %arg2[%c0_1, %c0_2] : memref<32x128xbf16, #tpu.memory_space<vmem>>, vector<32x128xbf16>
    %cst = arith.constant dense<0.000000e+00> : vector<8x128xf32>
    %2 = tpu.matmul %0, %1, %cst {dimension_numbers = #tpu.dot_dimension_numbers<[1], [0], [0], [1], [0, 0, 1, 1], [], []>} : vector<8x32xbf16>, vector<32x128xbf16>, vector<8x128xf32> -> vector<8x128xf32>
    %c0_3 = arith.constant 0 : index
    %c0_4 = arith.constant 0 : index
    %3 = vector.load %arg3[%c0_3, %c0_4] : memref<1x128xf32, #tpu.memory_space<vmem>>, vector<1x128xf32>
    %4 = vector.broadcast %3 : vector<1x128xf32> to vector<8x128xf32>
    %5 = arith.addf %2, %4 : vector<8x128xf32>
    %cst_5 = arith.constant 0.000000e+00 : f32
    %6 = vector.broadcast %cst_5 : f32 to vector<8x128xf32>
    %7 = arith.maximumf %5, %6 : vector<8x128xf32>
    %8 = arith.truncf %7 : vector<8x128xf32> to vector<8x128xbf16>
    %c0_6 = arith.constant 0 : index
    %c0_7 = arith.constant 0 : index
    %9 = vector.load %arg4[%c0_6, %c0_7] : memref<128x128xbf16, #tpu.memory_space<vmem>>, vector<128x128xbf16>
    %cst_8 = arith.constant dense<0.000000e+00> : vector<8x128xf32>
    %10 = tpu.matmul %8, %9, %cst_8 {dimension_numbers = #tpu.dot_dimension_numbers<[1], [0], [0], [1], [0, 0, 1, 1], [], []>} : vector<8x128xbf16>, vector<128x128xbf16>, vector<8x128xf32> -> vector<8x128xf32>
    %c0_9 = arith.constant 0 : index
    %c0_10 = arith.constant 0 : index
    %11 = vector.load %arg5[%c0_9, %c0_10] : memref<1x128xf32, #tpu.memory_space<vmem>>, vector<1x128xf32>
    %12 = vector.broadcast %11 : vector<1x128xf32> to vector<8x128xf32>
    %13 = arith.addf %10, %12 : vector<8x128xf32>
    %cst_11 = arith.constant 0.000000e+00 : f32
    %14 = vector.broadcast %cst_11 : f32 to vector<8x128xf32>
    %15 = arith.maximumf %13, %14 : vector<8x128xf32>
    %c0_12 = arith.constant 0 : index
    %c0_13 = arith.constant 0 : index
    %16 = vector.load %arg6[%c0_12, %c0_13] : memref<128x128xf32, #tpu.memory_space<vmem>>, vector<128x128xf32>
    %cst_14 = arith.constant dense<0.000000e+00> : vector<8x128xf32>
    %17 = tpu.matmul %15, %16, %cst_14 {dimension_numbers = #tpu.dot_dimension_numbers<[1], [0], [0], [1], [0, 0, 1, 1], [], []>} : vector<8x128xf32>, vector<128x128xf32>, vector<8x128xf32> -> vector<8x128xf32>
    %c0_15 = arith.constant 0 : index
    %c0_16 = arith.constant 0 : index
    %18 = vector.load %arg7[%c0_15, %c0_16] : memref<1x128xf32, #tpu.memory_space<vmem>>, vector<1x128xf32>
    %19 = vector.broadcast %18 : vector<1x128xf32> to vector<8x128xf32>
    %20 = arith.addf %17, %19 : vector<8x128xf32>
    %c0_17 = arith.constant 0 : index
    %c0_18 = arith.constant 0 : index
    %21 = vector.load %arg8[%c0_17, %c0_18] : memref<8x128xf32, #tpu.memory_space<vmem>>, vector<8x128xf32>
    tpu.vector_store %arg8[%c0_17, %c0_18], %20 {strides = array<i32>} : memref<8x128xf32, #tpu.memory_space<vmem>>, vector<8x128xf32>,
    return
  }
  func.func @transform_0(%arg0: i32) -> (i32, i32) {
    %c0_i32 = arith.constant 0 : i32
    %c0_i32_0 = arith.constant 0 : i32
    return %arg0, %c0_i32 : i32, i32
  }
  func.func @transform_1(%arg0: i32) -> (i32, i32) {
    %c0_i32 = arith.constant 0 : i32
    %c0_i32_0 = arith.constant 0 : i32
    %c0_i32_1 = arith.constant 0 : i32
    return %c0_i32, %c0_i32_0 : i32, i32
  }
  func.func @transform_2(%arg0: i32) -> (i32, i32) {
    %c0_i32 = arith.constant 0 : i32
    %c0_i32_0 = arith.constant 0 : i32
    %c0_i32_1 = arith.constant 0 : i32
    return %c0_i32, %c0_i32_0 : i32, i32
  }
  func.func @transform_3(%arg0: i32) -> (i32, i32) {
    %c0_i32 = arith.constant 0 : i32
    %c0_i32_0 = arith.constant 0 : i32
    %c0_i32_1 = arith.constant 0 : i32
    return %c0_i32, %c0_i32_0 : i32, i32
  }
  func.func @transform_4(%arg0: i32) -> (i32, i32) {
    %c0_i32 = arith.constant 0 : i32
    %c0_i32_0 = arith.constant 0 : i32
    %c0_i32_1 = arith.constant 0 : i32
    return %c0_i32, %c0_i32_0 : i32, i32
  }
  func.func @transform_5(%arg0: i32) -> (i32, i32) {
    %c0_i32 = arith.constant 0 : i32
    %c0_i32_0 = arith.constant 0 : i32
    %c0_i32_1 = arith.constant 0 : i32
    return %c0_i32, %c0_i32_0 : i32, i32
  }
  func.func @transform_6(%arg0: i32) -> (i32, i32) {
    %c0_i32 = arith.constant 0 : i32
    %c0_i32_0 = arith.constant 0 : i32
    %c0_i32_1 = arith.constant 0 : i32
    return %c0_i32, %c0_i32_0 : i32, i32
  }
  func.func @transform_7(%arg0: i32) -> (i32, i32) {
    %c0_i32 = arith.constant 0 : i32
    %c0_i32_0 = arith.constant 0 : i32
    return %arg0, %c0_i32 : i32, i32
  }
}

</mosaic_0001>

<llo_original>
// kernel: tpu_custom_call.1
$region0: #{tpu_custom_call.1}
  #allocation0 [shape = 'u32[]', space=smem, size = 0x4, offset = 0x4, fixed_abs, tag = 'smem constant byte address 0x4 - core index']
  #allocation1 [shape = 'u32[144,128]{1,0:T(1,128)}', space=vmem, size = 0x12000, scoped, tag = 'internal scratch']
  %s0 = inlined_call_operand.hbm [shape: bf16[8,32], index: 0, kind: input, shape index: {}]
  %s1 = inlined_call_operand.hbm [shape: bf16[32,128], index: 1, kind: input, shape index: {}]
  %s2 = inlined_call_operand.vmem [shape: f32[1,128], index: 2, kind: input, shape index: {}]
  %s3 = inlined_call_operand.hbm [shape: bf16[128,128], index: 3, kind: input, shape index: {}]
  %s4 = inlined_call_operand.vmem [shape: f32[1,128], index: 4, kind: input, shape index: {}]
  %s5 = inlined_call_operand.hbm [shape: f32[128,128], index: 5, kind: input, shape index: {}]
  %s6 = inlined_call_operand.vmem [shape: f32[1,128], index: 6, kind: input, shape index: {}]
  %s7 = inlined_call_operand.hbm [shape: f32[8,128], index: 7, kind: output, shape index: {}]
  %s8 = sld [smem:[#allocation0]]
  $region54: #{tpu_custom_call.1} parent=0
    _
  %s10 = ssub.s32 1, %s8
  %s11 = scalar_select 0, %s10, %s8
  $region1: #{tpu_custom_call.1} parent=0
    #allocation2 [shape = 'u8[2048]{0}', space=vmem, size = 0x800, scoped, tag = 'input window, operand 0, single buffered']
    #allocation3 [shape = 's32[1]{0}', space=sflag, size = 0x4, scoped, tag = 'scoped memory for tpu_custom_call.1']
    #allocation4 [shape = 's32[1]{0}', space=sflag, size = 0x4, scoped, tag = 'scoped memory for tpu_custom_call.1']
    #allocation5 [shape = 'u8[8192]{0}', space=vmem, size = 0x2000, scoped, tag = 'input window, operand 1, single buffered']
    #allocation6 [shape = 's32[1]{0}', space=sflag, size = 0x4, scoped, tag = 'scoped memory for tpu_custom_call.1']
    #allocation7 [shape = 'u8[32768]{0}', space=vmem, size = 0x8000, scoped, tag = 'input window, operand 3, single buffered']
    #allocation8 [shape = 'u8[65536]{0}', space=vmem, size = 0x10000, scoped, tag = 'input window, operand 5, single buffered']
    #allocation9 [shape = 's32[1]{0}', space=sflag, size = 0x4, scoped, tag = 'scoped memory for tpu_custom_call.1']
    #allocation10 [shape = 'u8[4096]{0}', space=vmem, size = 0x1000, scoped, tag = 'output window, operand 0, single buffered']
    %12 = vsyncpa [#allocation3], 0
    %13 = vsyncpa [#allocation6], 0
    %14 = vsyncpa [#allocation9], 0
    %15 = vsyncpa [#allocation4], 0
    // Predicated region
    $region2: #{tpu_custom_call.1} parent=1 // pred_check
      _
    $region3: #{tpu_custom_call.1} parent=1 // pred_check_branch
      %17 = sbr.rel (0) target = $region5
    $region4: #{tpu_custom_call.1} parent=1 // pred_region
      %s19 = ssub.s32 64, 64
      %20 = vsyncadd [#allocation3], %s19
      %s22 = sshll.u32 [#allocation2], 4
      %s23 = int_to_ptr.vmem [resolvable:$true] %s22
      %25 = dma.hbm_to_vmem [thread:$0]  %s0, 64, %s23, [#allocation3]
    $region5: #{tpu_custom_call.1} parent=1 // pred_fallthru
      _
    // Predicated region
    $region6: #{tpu_custom_call.1} parent=1 // pred_check
      _
    $region7: #{tpu_custom_call.1} parent=1 // pred_check_branch
      %27 = sbr.rel (0) target = $region9
    $region8: #{tpu_custom_call.1} parent=1 // pred_region
      %s29 = ssub.s32 256, 256
      %30 = vsyncadd [#allocation6], %s29
      %s31 = sshll.u32 [#allocation5], 4
      %s32 = int_to_ptr.vmem [resolvable:$true] %s31
      %37 = dma.hbm_to_vmem [thread:$0]  %s1, 256, %s32, [#allocation6], 64, 64, 4
    $region9: #{tpu_custom_call.1} parent=1 // pred_fallthru
      _
    // Predicated region
    $region10: #{tpu_custom_call.1} parent=1 // pred_check
      _
    $region11: #{tpu_custom_call.1} parent=1 // pred_check_branch
      %39 = sbr.rel (0) target = $region13
    $region12: #{tpu_custom_call.1} parent=1 // pred_region
      _
    $region13: #{tpu_custom_call.1} parent=1 // pred_fallthru
      _
    // Predicated region
    $region14: #{tpu_custom_call.1} parent=1 // pred_check
      _
    $region15: #{tpu_custom_call.1} parent=1 // pred_check_branch
      %41 = sbr.rel (0) target = $region17
    $region16: #{tpu_custom_call.1} parent=1 // pred_region
      %s43 = ssub.s32 1024, 1024
      %44 = vsyncadd [#allocation6], %s43
      %s45 = sshll.u32 [#allocation7], 4
      %s46 = int_to_ptr.vmem [resolvable:$true] %s45
      %51 = dma.hbm_to_vmem [thread:$0]  %s3, 1024, %s46, [#allocation6], 64, 64, 4
    $region17: #{tpu_custom_call.1} parent=1 // pred_fallthru
      _
    // Predicated region
    $region18: #{tpu_custom_call.1} parent=1 // pred_check
      _
    $region19: #{tpu_custom_call.1} parent=1 // pred_check_branch
      %53 = sbr.rel (0) target = $region21
    $region20: #{tpu_custom_call.1} parent=1 // pred_region
      _
    $region21: #{tpu_custom_call.1} parent=1 // pred_fallthru
      _
    // Predicated region
    $region22: #{tpu_custom_call.1} parent=1 // pred_check
      _
    $region23: #{tpu_custom_call.1} parent=1 // pred_check_branch
      %55 = sbr.rel (0) target = $region25
    $region24: #{tpu_custom_call.1} parent=1 // pred_region
      %s57 = ssub.s32 2048, 2048
      %58 = vsyncadd [#allocation9], %s57
      %s59 = sshll.u32 [#allocation8], 4
      %s60 = int_to_ptr.vmem [resolvable:$true] %s59
      %65 = dma.hbm_to_vmem [thread:$0]  %s5, 2048, %s60, [#allocation9], 128, 128, 8
    $region25: #{tpu_custom_call.1} parent=1 // pred_fallthru
      _
    // Predicated region
    $region26: #{tpu_custom_call.1} parent=1 // pred_check
      _
    $region27: #{tpu_custom_call.1} parent=1 // pred_check_branch
      %67 = sbr.rel (0) target = $region29
    $region28: #{tpu_custom_call.1} parent=1 // pred_region
      _
    $region29: #{tpu_custom_call.1} parent=1 // pred_fallthru
      _
    // Predicated region
    $region30: #{tpu_custom_call.1} parent=1 // pred_check
      _
    $region31: #{tpu_custom_call.1} parent=1 // pred_check_branch
      %69 = sbr.rel (0) target = $region33
    $region32: #{tpu_custom_call.1} parent=1 // pred_region
      %70 = dma.done [#allocation3], 64
    $region33: #{tpu_custom_call.1} parent=1 // pred_fallthru
      _
    // Predicated region
    $region34: #{tpu_custom_call.1} parent=1 // pred_check
      _
    $region35: #{tpu_custom_call.1} parent=1 // pred_check_branch
      %72 = sbr.rel (0) target = $region37
    $region36: #{tpu_custom_call.1} parent=1 // pred_region
      %73 = dma.done [#allocation6], 256
    $region37: #{tpu_custom_call.1} parent=1 // pred_fallthru
      _
    // Predicated region
    $region38: #{tpu_custom_call.1} parent=1 // pred_check
      _
    $region39: #{tpu_custom_call.1} parent=1 // pred_check_branch
      %75 = sbr.rel (0) target = $region41
    $region40: #{tpu_custom_call.1} parent=1 // pred_region
      %76 = dma.done [#allocation6], 1024
    $region41: #{tpu_custom_call.1} parent=1 // pred_fallthru
      _
    // Predicated region
    $region42: #{tpu_custom_call.1} parent=1 // pred_check
      _
    $region43: #{tpu_custom_call.1} parent=1 // pred_check_branch
      %78 = sbr.rel (0) target = $region45
    $region44: #{tpu_custom_call.1} parent=1 // pred_region
      %79 = dma.done [#allocation9], 2048
    $region45: #{tpu_custom_call.1} parent=1 // pred_fallthru
      _
    %v81 = vld [vmem:[#allocation2] sm:$0xf]
    %v82 = vld [vmem:[#allocation5] sm:$0xf]
    %v83 = vld [vmem:[#allocation5 + $0x4] sm:$0xf]
    %v84 = vld [vmem:[#allocation5 + $0x8] sm:$0xf]
    %v85 = vld [vmem:[#allocation5 + $0xc] sm:$0xf]
    %v86 = vld [vmem:[%s2] sm:$0x1]
    %v88 = vlaneseq
    %v89 = vshrl.u32 %v88, 7
    %v90 = vsub.s32 0, %v89
    %v91 = vrot.slane %v86, %v90
    %v97 = vunpack.c.l.b16 %v82
    %v98 = vunpack.c.l.b16 %v83
    %v99 = vunpack.c.l.b16 %v84
    %v100 = vunpack.c.l.b16 %v85
    %v101 = vpack.c.b16 %v98, %v97
    %v102 = vpack.c.b16 %v100, %v99
    %vm105 = vcmask 261120
    %v107 = vsel %vm105, %v81, 0
    %109 = vmatprep.subr.bf16.mxu0 0
    %110 = vmatpush1.bf16.msra.mxu0 0
    %111 = vmatprep.subr.bf16.mxu0 0
    %112 = vmatpush1.bf16.msra.mxu0 0
    %113 = vmatprep.subr.bf16.mxu0 0
    %114 = vmatpush1.bf16.msra.mxu0 0
    %115 = vmatprep.subr.bf16.mxu0 0
    %116 = vmatpush1.bf16.msra.mxu0 0
    %117 = vmatprep.subr.bf16.mxu0 0
    %118 = vmatpush1.bf16.msra.mxu0 0
    %119 = vmatprep.subr.bf16.mxu0 0
    %120 = vmatpush1.bf16.msra.mxu0 0
    %121 = vmatprep.subr.bf16.mxu0 0
    %122 = vmatpush1.bf16.msra.mxu0 %v102
    %123 = vmatprep.subr.bf16.mxu0 0
    %124 = vmatpush1.bf16.msra.mxu0 %v101
    %125 = vmatprep.subr.bf16.mxu0 0
    %126 = vmatpush2.bf16.msra.mxu0 0
    %127 = vmatprep.subr.bf16.mxu0 0
    %128 = vmatpush2.bf16.msra.mxu0 0
    %129 = vmatprep.subr.bf16.mxu0 0
    %130 = vmatpush2.bf16.msra.mxu0 0
    %131 = vmatprep.subr.bf16.mxu0 0
    %132 = vmatpush2.bf16.msra.mxu0 0
    %133 = vmatprep.subr.bf16.mxu0 0
    %134 = vmatpush2.bf16.msra.mxu0 0
    %135 = vmatprep.subr.bf16.mxu0 0
    %136 = vmatpush2.bf16.msra.mxu0 0
    %137 = vmatprep.subr.bf16.mxu0 0
    %138 = vmatpush2.bf16.msra.mxu0 0
    %139 = vmatprep.subr.bf16.mxu0 0
    %140 = vmatpush2.bf16.msra.mxu0 0
    %141 = vmatprep.mubr.bf16.mxu0 0
    %142 = vmatmul.mubr.bf16.gmra.mxu0 %v107
    %v143 = vpop.f32.mrf.mxu0
    %v144 = vadd.f32 %v91, %v143
    %v145 = vpop.f32.mrf.mxu0
    %v146 = vpop.f32.mrf.mxu0
    %v147 = vpop.f32.mrf.mxu0
    %148 = vdwg.mxu0
    %v149 = vmax.f32 %v144, 0.0
    %v150 = vpack.c.bf16 %v149, %v149
    %v151 = vld [vmem:[#allocation7] sm:$0xf]
    %v152 = vld [vmem:[#allocation7 + $0x4] sm:$0xf]
    %v153 = vld [vmem:[#allocation7 + $0x8] sm:$0xf]
    %v154 = vld [vmem:[#allocation7 + $0xc] sm:$0xf]
    %v155 = vld [vmem:[#allocation7 + $0x10] sm:$0xf]
    %v156 = vld [vmem:[#allocation7 + $0x14] sm:$0xf]
    %v157 = vld [vmem:[#allocation7 + $0x18] sm:$0xf]
    %v158 = vld [vmem:[#allocation7 + $0x1c] sm:$0xf]
    %v159 = vld [vmem:[#allocation7 + $0x20] sm:$0xf]
    %v160 = vld [vmem:[#allocation7 + $0x24] sm:$0xf]
    %v161 = vld [vmem:[#allocation7 + $0x28] sm:$0xf]
    %v162 = vld [vmem:[#allocation7 + $0x2c] sm:$0xf]
    %v163 = vld [vmem:[#allocation7 + $0x30] sm:$0xf]
    %v164 = vld [vmem:[#allocation7 + $0x34] sm:$0xf]
    %v165 = vld [vmem:[#allocation7 + $0x38] sm:$0xf]
    %v166 = vld [vmem:[#allocation7 + $0x3c] sm:$0xf]
    %v167 = vld [vmem:[%s4] sm:$0x1]
    %v169 = vlaneseq
    %v170 = vshrl.u32 %v169, 7
    %v171 = vsub.s32 0, %v170
    %v172 = vrot.slane %v167, %v171
    %v190 = vunpack.c.l.b16 %v151
    %v191 = vunpack.c.l.b16 %v152
    %v192 = vunpack.c.l.b16 %v153
    %v193 = vunpack.c.l.b16 %v154
    %v194 = vunpack.c.l.b16 %v155
    %v195 = vunpack.c.l.b16 %v156
    %v196 = vunpack.c.l.b16 %v157
    %v197 = vunpack.c.l.b16 %v158
    %v198 = vunpack.c.l.b16 %v159
    %v199 = vunpack.c.l.b16 %v160
    %v200 = vunpack.c.l.b16 %v161
    %v201 = vunpack.c.l.b16 %v162
    %v202 = vunpack.c.l.b16 %v163
    %v203 = vunpack.c.l.b16 %v164
    %v204 = vunpack.c.l.b16 %v165
    %v205 = vunpack.c.l.b16 %v166
    %v206 = vpack.c.b16 %v191, %v190
    %v207 = vpack.c.b16 %v193, %v192
    %v208 = vpack.c.b16 %v195, %v194
    %v209 = vpack.c.b16 %v197, %v196
    %v210 = vpack.c.b16 %v199, %v198
    %v211 = vpack.c.b16 %v201, %v200
    %v212 = vpack.c.b16 %v203, %v202
    %v213 = vpack.c.b16 %v205, %v204
    %222 = vmatprep.subr.bf16.mxu0 0
    %223 = vmatpush1.bf16.msra.mxu0 %v213
    %224 = vmatprep.subr.bf16.mxu0 0
    %225 = vmatpush1.bf16.msra.mxu0 %v212
    %226 = vmatprep.subr.bf16.mxu0 0
    %227 = vmatpush1.bf16.msra.mxu0 %v211
    %228 = vmatprep.subr.bf16.mxu0 0
    %229 = vmatpush1.bf16.msra.mxu0 %v210
    %230 = vmatprep.subr.bf16.mxu0 0
    %231 = vmatpush1.bf16.msra.mxu0 %v209
    %232 = vmatprep.subr.bf16.mxu0 0
    %233 = vmatpush1.bf16.msra.mxu0 %v208
    %234 = vmatprep.subr.bf16.mxu0 0
    %235 = vmatpush1.bf16.msra.mxu0 %v207
    %236 = vmatprep.subr.bf16.mxu0 0
    %237 = vmatpush1.bf16.msra.mxu0 %v206
    %238 = vmatprep.subr.bf16.mxu0 0
    %239 = vmatpush2.bf16.msra.mxu0 0
    %240 = vmatprep.subr.bf16.mxu0 0
    %241 = vmatpush2.bf16.msra.mxu0 0
    %242 = vmatprep.subr.bf16.mxu0 0
    %243 = vmatpush2.bf16.msra.mxu0 0
    %244 = vmatprep.subr.bf16.mxu0 0
    %245 = vmatpush2.bf16.msra.mxu0 0
    %246 = vmatprep.subr.bf16.mxu0 0
    %247 = vmatpush2.bf16.msra.mxu0 0
    %248 = vmatprep.subr.bf16.mxu0 0
    %249 = vmatpush2.bf16.msra.mxu0 0
    %250 = vmatprep.subr.bf16.mxu0 0
    %251 = vmatpush2.bf16.msra.mxu0 0
    %252 = vmatprep.subr.bf16.mxu0 0
    %253 = vmatpush2.bf16.msra.mxu0 0
    %254 = vmatprep.mubr.bf16.mxu0 0
    %255 = vmatmul.mubr.bf16.gmra.mxu0 %v150
    %v256 = vpop.f32.mrf.mxu0
    %v257 = vadd.f32 %v172, %v256
    %v258 = vpop.f32.mrf.mxu0
    %v259 = vpop.f32.mrf.mxu0
    %v260 = vpop.f32.mrf.mxu0
    %261 = vdwg.mxu0
    %v262 = vmax.f32 %v257, 0.0
    %v263 = vld [vmem:[#allocation8] sm:$0xff]
    %v264 = vld [vmem:[#allocation8 + $0x8] sm:$0xff]
    %v265 = vld [vmem:[#allocation8 + $0x10] sm:$0xff]
    %v266 = vld [vmem:[#allocation8 + $0x18] sm:$0xff]
    %v267 = vld [vmem:[#allocation8 + $0x20] sm:$0xff]
    %v268 = vld [vmem:[#allocation8 + $0x28] sm:$0xff]
    %v269 = vld [vmem:[#allocation8 + $0x30] sm:$0xff]
    %v270 = vld [vmem:[#allocation8 + $0x38] sm:$0xff]
    %v271 = vld [vmem:[#allocation8 + $0x40] sm:$0xff]
    %v272 = vld [vmem:[#allocation8 + $0x48] sm:$0xff]
    %v273 = vld [vmem:[#allocation8 + $0x50] sm:$0xff]
    %v274 = vld [vmem:[#allocation8 + $0x58] sm:$0xff]
    %v275 = vld [vmem:[#allocation8 + $0x60] sm:$0xff]
    %v276 = vld [vmem:[#allocation8 + $0x68] sm:$0xff]
    %v277 = vld [vmem:[#allocation8 + $0x70] sm:$0xff]
    %v278 = vld [vmem:[#allocation8 + $0x78] sm:$0xff]
    %v279 = vld [vmem:[%s6] sm:$0x1]
    %v281 = vlaneseq
    %v282 = vshrl.u32 %v281, 7
    %v283 = vsub.s32 0, %v282
    %v284 = vrot.slane %v279, %v283
    %286 = vmatprep.subr.mxu0 0.0
    %287 = vmatpush1.msra.mxu0 %v278
    %288 = vmatprep.subr.mxu0 0.0
    %289 = vmatpush1.msra.mxu0 %v277
    %290 = vmatprep.subr.mxu0 0.0
    %291 = vmatpush1.msra.mxu0 %v276
    %292 = vmatprep.subr.mxu0 0.0
    %293 = vmatpush1.msra.mxu0 %v275
    %294 = vmatprep.subr.mxu0 0.0
    %295 = vmatpush1.msra.mxu0 %v274
    %296 = vmatprep.subr.mxu0 0.0
    %297 = vmatpush1.msra.mxu0 %v273
    %298 = vmatprep.subr.mxu0 0.0
    %299 = vmatpush1.msra.mxu0 %v272
    %300 = vmatprep.subr.mxu0 0.0
    %301 = vmatpush1.msra.mxu0 %v271
    %302 = vmatprep.subr.mxu0 0.0
    %303 = vmatpush1.msra.mxu0 %v270
    %304 = vmatprep.subr.mxu0 0.0
    %305 = vmatpush1.msra.mxu0 %v269
    %306 = vmatprep.subr.mxu0 0.0
    %307 = vmatpush1.msra.mxu0 %v268
    %308 = vmatprep.subr.mxu0 0.0
    %309 = vmatpush1.msra.mxu0 %v267
    %310 = vmatprep.subr.mxu0 0.0
    %311 = vmatpush1.msra.mxu0 %v266
    %312 = vmatprep.subr.mxu0 0.0
    %313 = vmatpush1.msra.mxu0 %v265
    %314 = vmatprep.subr.mxu0 0.0
    %315 = vmatpush1.msra.mxu0 %v264
    %316 = vmatprep.subr.mxu0 0.0
    %317 = vmatpush1.msra.mxu0 %v263
    %318 = vmatprep.subr.mxu0 0.0
    %319 = vmatpush2.msra.mxu0 0.0
    %320 = vmatprep.subr.mxu0 0.0
    %321 = vmatpush2.msra.mxu0 0.0
    %322 = vmatprep.subr.mxu0 0.0
    %323 = vmatpush2.msra.mxu0 0.0
    %324 = vmatprep.subr.mxu0 0.0
    %325 = vmatpush2.msra.mxu0 0.0
    %326 = vmatprep.subr.mxu0 0.0
    %327 = vmatpush2.msra.mxu0 0.0
    %328 = vmatprep.subr.mxu0 0.0
    %329 = vmatpush2.msra.mxu0 0.0
    %330 = vmatprep.subr.mxu0 0.0
    %331 = vmatpush2.msra.mxu0 0.0
    %332 = vmatprep.subr.mxu0 0.0
    %333 = vmatpush2.msra.mxu0 0.0
    %334 = vmatprep.subr.mxu0 0.0
    %335 = vmatpush2.msra.mxu0 0.0
    %336 = vmatprep.subr.mxu0 0.0
    %337 = vmatpush2.msra.mxu0 0.0
    %338 = vmatprep.subr.mxu0 0.0
    %339 = vmatpush2.msra.mxu0 0.0
    %340 = vmatprep.subr.mxu0 0.0
    %341 = vmatpush2.msra.mxu0 0.0
    %342 = vmatprep.subr.mxu0 0.0
    %343 = vmatpush2.msra.mxu0 0.0
    %344 = vmatprep.subr.mxu0 0.0
    %345 = vmatpush2.msra.mxu0 0.0
    %346 = vmatprep.subr.mxu0 0.0
    %347 = vmatpush2.msra.mxu0 0.0
    %348 = vmatprep.subr.mxu0 0.0
    %349 = vmatpush2.msra.mxu0 0.0
    %350 = vmatprep.mubr.f32.mxu0 0.0
    %351 = vmatmul.mubr.f32.gmra.mxu0 %v262
    %v352 = vpop.f32.mrf.mxu0
    %v353 = vadd.f32 %v284, %v352
    %v354 = vpop.f32.mrf.mxu0
    %355 = vdwg.mxu0
    %356 = vst [vmem:[#allocation10] sm:$0xff] %v353
    // Predicated region
    $region46: #{tpu_custom_call.1} parent=1 // pred_check
      _
    $region47: #{tpu_custom_call.1} parent=1 // pred_check_branch
      %358 = sbr.rel (0) target = $region49
    $region48: #{tpu_custom_call.1} parent=1 // pred_region
      %s360 = ssub.s32 128, 128
      %361 = vsyncadd [#allocation4], %s360
      %s363 = sshll.u32 [#allocation10], 4
      %s364 = int_to_ptr.vmem [resolvable:$true] %s363
      %366 = dma.vmem_to_hbm [thread:$0]  %s364, 128, %s7, [#allocation4]
    $region49: #{tpu_custom_call.1} parent=1 // pred_fallthru
      _
    // Predicated region
    $region50: #{tpu_custom_call.1} parent=1 // pred_check
      _
    $region51: #{tpu_custom_call.1} parent=1 // pred_check_branch
      %368 = sbr.rel (0) target = $region53
    $region52: #{tpu_custom_call.1} parent=1 // pred_region
      %369 = dma.done [#allocation4], 128
    $region53: #{tpu_custom_call.1} parent=1 // pred_fallthru
      _
    %370 = vsyncpa [#allocation3], 1
    %371 = vsyncpa [#allocation6], 1
    %372 = vsyncpa [#allocation9], 1
    %373 = vsyncpa [#allocation4], 1

</llo_original>
